<compile_context>
chip_gen: v5e
topology: v5e:2x2
jax: 0.10.0
libtpu: 0.0.40
codegen_flags: <defaults>
</compile_context>

<pallas_src>
import jax
import jax.numpy as jnp
from jax.experimental import pallas as pl
from jax.experimental.pallas import tpu as pltpu

K_IN = 28 ** 2   # 784
N_OUT = 10


def _cdiv(a, b):
    return -(-a // b)


def _round_up(x, m):
    return _cdiv(x, m) * m


def _mlp_kernel(x_ref, w1_ref, b1_ref, w2_ref, b2_ref, o_ref):
    # Fused: relu(relu(x @ W1 + b1) @ W2 + b2).  bf16 MXU operands, f32 accumulation.
    x = x_ref[...].astype(jnp.bfloat16)
    h = jnp.dot(x, w1_ref[...], preferred_element_type=jnp.float32)      # (TB, H) f32
    h = jnp.maximum(h + b1_ref[...], 0.0)                                 # ReLU
    y = jnp.dot(h.astype(jnp.bfloat16), w2_ref[...],
                preferred_element_type=jnp.float32)                       # (TB, 10) f32
    y = jnp.maximum(y + b2_ref[...], 0.0)                                 # ReLU
    o_ref[...] = y.astype(o_ref.dtype)


def neuralnet_1layer_forward(x, w1, b1, w2, b2):
    """x: any shape whose trailing dims flatten to 784 per row (e.g. (B,1,28,28)).
    w1: (784, H), b1: (H,), w2: (H, 10), b2: (10,).
    Returns relu(relu(x@W1+b1)@W2+b2), squeezed (matching torch's x.squeeze())."""
    x2d = x.reshape(-1, K_IN).astype(jnp.float32)          # x.view(-1, 784); no K/B padding
    B = x2d.shape[0]
    H = w1.shape[1]

    # Batch tile: multiple of 8; up to 1024 rows (fits default scoped VMEM everywhere);
    # for B > 512 choose TB so there are >= 2 tiles (keeps both v7x TensorCores busy).
    if B <= 512:
        TB = _round_up(B, 8)
    else:
        TB = min(1024, _round_up(_cdiv(B, 2), 256))
    n_tiles = _cdiv(B, TB)                                  # ragged last tile is masked

    # bf16 weights (fast MXU path, half the resident bytes); biases stay f32 (added to
    # the f32 accumulator).  These casts are tiny one-time copies.
    w1b = w1.astype(jnp.bfloat16)
    w2b = w2.astype(jnp.bfloat16)
    b1f = b1.astype(jnp.float32).reshape(1, H)
    b2f = b2.astype(jnp.float32).reshape(1, N_OUT)

    cost = pl.CostEstimate(
        flops=2 * B * K_IN * H + 2 * B * H * N_OUT,
        transcendentals=0,
        bytes_accessed=(x2d.size * 4 + w1b.size * 2 + b1f.size * 4
                        + w2b.size * 2 + b2f.size * 4 + B * N_OUT * 4),
    )

    out = pl.pallas_call(
        _mlp_kernel,
        out_shape=jax.ShapeDtypeStruct((B, N_OUT), jnp.float32),
        grid_spec=pltpu.PrefetchScalarGridSpec(
            num_scalar_prefetch=0,
            grid=(n_tiles,),
            in_specs=[
                pl.BlockSpec((TB, K_IN), lambda i: (i, 0)),   # x tile (pipelined; full 784-lane dim)
                pl.BlockSpec((K_IN, H), lambda i: (0, 0)),    # W1 resident in VMEM
                pl.BlockSpec((1, H), lambda i: (0, 0)),       # b1 resident
                pl.BlockSpec((H, N_OUT), lambda i: (0, 0)),   # W2 resident
                pl.BlockSpec((1, N_OUT), lambda i: (0, 0)),   # b2 resident
            ],
            out_specs=pl.BlockSpec((TB, N_OUT), lambda i: (i, 0)),  # narrow full-dim output block
        ),
        compiler_params=pltpu.CompilerParams(
            dimension_semantics=("parallel",),                # shards batch tiles on v7x's 2 TCs
        ),
        cost_estimate=cost,
    )(x2d, w1b, b1f, w2b, b2f)

    # Matches torch's .squeeze() (e.g. B==1 -> shape (10,)).
    return jnp.squeeze(out)


def init_params(key, n_neurons):
    """PyTorch nn.Linear default init: U(-1/sqrt(fan_in), 1/sqrt(fan_in))."""
    k1, k2, k3, k4 = jax.random.split(key, 4)
    lim1 = 1.0 / jnp.sqrt(jnp.float32(K_IN))
    lim2 = 1.0 / jnp.sqrt(jnp.float32(n_neurons))
    w1 = jax.random.uniform(k1, (K_IN, n_neurons), jnp.float32, -lim1, lim1)
    b1 = jax.random.uniform(k2, (n_neurons,), jnp.float32, -lim1, lim1)
    w2 = jax.random.uniform(k3, (n_neurons, N_OUT), jnp.float32, -lim2, lim2)
    b2 = jax.random.uniform(k4, (N_OUT,), jnp.float32, -lim2, lim2)
    return w1, b1, w2, b2


if __name__ == "__main__":
    key = jax.random.PRNGKey(0)
    k_x, k_p = jax.random.split(key)

    n_neurons = 32
    batch = 2
    # Input analogous to an MNIST batch (NCHW), flattened inside the forward.
    x = jax.random.normal(k_x, (batch, 1, 28, 28), jnp.float32)

    w1, b1, w2, b2 = init_params(k_p, n_neurons)

    out = neuralnet_1layer_forward(x, w1, b1, w2, b2)
    out = jax.block_until_ready(out)

    # Reference check in plain JAX (f32).  Kernel uses bf16 MXU operands with f32
    # accumulation, so allow a correspondingly relaxed tolerance.
    x2d = x.reshape(-1, K_IN)
    ref = jnp.maximum(jnp.maximum(x2d @ w1 + b1, 0.0) @ w2 + b2, 0.0)
    ref = jnp.squeeze(ref)
    assert out.shape == ref.shape == (batch, 10), (out.shape, ref.shape)
    assert bool(jnp.all(jnp.isfinite(out)))
    assert jnp.allclose(out, ref, atol=2e-2, rtol=2e-2), float(jnp.max(jnp.abs(out - ref)))

    print("KERNEL_OK")
</pallas_src>

<mosaic_0001>
module attributes {stable_mosaic.version = 11 : i64} {
  func.func @_mlp_kernel(%arg0: i32, %arg1: memref<8x784xf32, #tpu.memory_space<vmem>>, %arg2: memref<784x32xbf16, #tpu.memory_space<vmem>>, %arg3: memref<1x32xf32, #tpu.memory_space<vmem>>, %arg4: memref<32x10xbf16, #tpu.memory_space<vmem>>, %arg5: memref<1x10xf32, #tpu.memory_space<vmem>>, %arg6: memref<8x10xf32, #tpu.memory_space<vmem>>) attributes {dimension_semantics = [#tpu.dimension_semantics<parallel>], iteration_bounds = array<i64: 1>, scalar_prefetch = 0 : i64, scratch_operands = 0 : i64, tpu.core_type = #tpu.core_type<tc>, window_params = [{transform_indices = @transform_0, window_bounds = array<i64: 8, 784>}, {pipeline_mode = #tpu.pipeline_mode<synchronous>, transform_indices = @transform_1, window_bounds = array<i64: 784, 32>}, {pipeline_mode = #tpu.pipeline_mode<synchronous>, transform_indices = @transform_2, window_bounds = array<i64: 1, 32>}, {pipeline_mode = #tpu.pipeline_mode<synchronous>, transform_indices = @transform_3, window_bounds = array<i64: 32, 10>}, {pipeline_mode = #tpu.pipeline_mode<synchronous>, transform_indices = @transform_4, window_bounds = array<i64: 1, 10>}, {transform_indices = @transform_5, window_bounds = array<i64: 8, 10>}]} {
    %c0 = arith.constant 0 : index
    %c0_0 = arith.constant 0 : index
    %0 = vector.load %arg1[%c0, %c0_0] : memref<8x784xf32, #tpu.memory_space<vmem>>, vector<8x784xf32>
    %1 = arith.truncf %0 : vector<8x784xf32> to vector<8x784xbf16>
    %c0_1 = arith.constant 0 : index
    %c0_2 = arith.constant 0 : index
    %2 = vector.load %arg2[%c0_1, %c0_2] : memref<784x32xbf16, #tpu.memory_space<vmem>>, vector<784x32xbf16>
    %cst = arith.constant dense<0.000000e+00> : vector<8x32xf32>
    %3 = tpu.matmul %1, %2, %cst {dimension_numbers = #tpu.dot_dimension_numbers<[1], [0], [0], [1], [0, 0, 1, 1], [], []>} : vector<8x784xbf16>, vector<784x32xbf16>, vector<8x32xf32> -> vector<8x32xf32>
    %c0_3 = arith.constant 0 : index
    %c0_4 = arith.constant 0 : index
    %4 = vector.load %arg3[%c0_3, %c0_4] : memref<1x32xf32, #tpu.memory_space<vmem>>, vector<1x32xf32>
    %5 = vector.broadcast %4 : vector<1x32xf32> to vector<8x32xf32>
    %6 = arith.addf %3, %5 : vector<8x32xf32>
    %cst_5 = arith.constant 0.000000e+00 : f32
    %7 = vector.broadcast %cst_5 : f32 to vector<8x32xf32>
    %8 = arith.maximumf %6, %7 : vector<8x32xf32>
    %9 = arith.truncf %8 : vector<8x32xf32> to vector<8x32xbf16>
    %c0_6 = arith.constant 0 : index
    %c0_7 = arith.constant 0 : index
    %10 = vector.load %arg4[%c0_6, %c0_7] : memref<32x10xbf16, #tpu.memory_space<vmem>>, vector<32x10xbf16>
    %cst_8 = arith.constant dense<0.000000e+00> : vector<8x10xf32>
    %11 = tpu.matmul %9, %10, %cst_8 {dimension_numbers = #tpu.dot_dimension_numbers<[1], [0], [0], [1], [0, 0, 1, 1], [], []>} : vector<8x32xbf16>, vector<32x10xbf16>, vector<8x10xf32> -> vector<8x10xf32>
    %c0_9 = arith.constant 0 : index
    %c0_10 = arith.constant 0 : index
    %12 = vector.load %arg5[%c0_9, %c0_10] : memref<1x10xf32, #tpu.memory_space<vmem>>, vector<1x10xf32>
    %13 = vector.broadcast %12 : vector<1x10xf32> to vector<8x10xf32>
    %14 = arith.addf %11, %13 : vector<8x10xf32>
    %cst_11 = arith.constant 0.000000e+00 : f32
    %15 = vector.broadcast %cst_11 : f32 to vector<8x10xf32>
    %16 = arith.maximumf %14, %15 : vector<8x10xf32>
    %c0_12 = arith.constant 0 : index
    %c0_13 = arith.constant 0 : index
    %17 = vector.load %arg6[%c0_12, %c0_13] : memref<8x10xf32, #tpu.memory_space<vmem>>, vector<8x10xf32>
    tpu.vector_store %arg6[%c0_12, %c0_13], %16 {strides = array<i32>} : memref<8x10xf32, #tpu.memory_space<vmem>>, vector<8x10xf32>,
    return
  }
  func.func @transform_0(%arg0: i32) -> (i32, i32) {
    %c0_i32 = arith.constant 0 : i32
    %c0_i32_0 = arith.constant 0 : i32
    return %arg0, %c0_i32 : i32, i32
  }
  func.func @transform_1(%arg0: i32) -> (i32, i32) {
    %c0_i32 = arith.constant 0 : i32
    %c0_i32_0 = arith.constant 0 : i32
    %c0_i32_1 = arith.constant 0 : i32
    return %c0_i32, %c0_i32_0 : i32, i32
  }
  func.func @transform_2(%arg0: i32) -> (i32, i32) {
    %c0_i32 = arith.constant 0 : i32
    %c0_i32_0 = arith.constant 0 : i32
    %c0_i32_1 = arith.constant 0 : i32
    return %c0_i32, %c0_i32_0 : i32, i32
  }
  func.func @transform_3(%arg0: i32) -> (i32, i32) {
    %c0_i32 = arith.constant 0 : i32
    %c0_i32_0 = arith.constant 0 : i32
    %c0_i32_1 = arith.constant 0 : i32
    return %c0_i32, %c0_i32_0 : i32, i32
  }
  func.func @transform_4(%arg0: i32) -> (i32, i32) {
    %c0_i32 = arith.constant 0 : i32
    %c0_i32_0 = arith.constant 0 : i32
    %c0_i32_1 = arith.constant 0 : i32
    return %c0_i32, %c0_i32_0 : i32, i32
  }
  func.func @transform_5(%arg0: i32) -> (i32, i32) {
    %c0_i32 = arith.constant 0 : i32
    %c0_i32_0 = arith.constant 0 : i32
    return %arg0, %c0_i32 : i32, i32
  }
}

</mosaic_0001>

<llo_original>
// kernel: tpu_custom_call.1
$region0: #{tpu_custom_call.1}
  #allocation0 [shape = 'u32[]', space=smem, size = 0x4, offset = 0x4, fixed_abs, tag = 'smem constant byte address 0x4 - core index']
  #allocation1 [shape = 'u32[72,128]{1,0:T(1,128)}', space=vmem, size = 0x9000, scoped, tag = 'internal scratch']
  %s0 = inlined_call_operand.vmem [shape: f32[2,784], index: 0, kind: input, shape index: {}]
  %s1 = inlined_call_operand.vmem [shape: bf16[784,32], index: 1, kind: input, shape index: {}]
  %s2 = inlined_call_operand.vmem [shape: f32[1,32], index: 2, kind: input, shape index: {}]
  %s3 = inlined_call_operand.vmem [shape: bf16[32,10], index: 3, kind: input, shape index: {}]
  %s4 = inlined_call_operand.vmem [shape: f32[1,10], index: 4, kind: input, shape index: {}]
  %s5 = inlined_call_operand.hbm [shape: f32[2,10], index: 5, kind: output, shape index: {}]
  %s6 = sld [smem:[#allocation0]]
  $region30: #{tpu_custom_call.1} parent=0
    _
  %s8 = ssub.s32 1, %s6
  %s9 = scalar_select 0, %s8, %s6
  $region1: #{tpu_custom_call.1} parent=0
    #allocation2 [shape = 'u8[4096]{0}', space=vmem, size = 0x1000, scoped, tag = 'output window, operand 0, single buffered']
    #allocation3 [shape = 's32[1]{0}', space=sflag, size = 0x4, scoped, tag = 'scoped memory for tpu_custom_call.1']
    %10 = vsyncpa [#allocation3], 0
    // Predicated region
    $region2: #{tpu_custom_call.1} parent=1 // pred_check
      _
    $region3: #{tpu_custom_call.1} parent=1 // pred_check_branch
      %12 = sbr.rel (0) target = $region5
    $region4: #{tpu_custom_call.1} parent=1 // pred_region
      _
    $region5: #{tpu_custom_call.1} parent=1 // pred_fallthru
      _
    // Predicated region
    $region6: #{tpu_custom_call.1} parent=1 // pred_check
      _
    $region7: #{tpu_custom_call.1} parent=1 // pred_check_branch
      %14 = sbr.rel (0) target = $region9
    $region8: #{tpu_custom_call.1} parent=1 // pred_region
      _
    $region9: #{tpu_custom_call.1} parent=1 // pred_fallthru
      _
    // Predicated region
    $region10: #{tpu_custom_call.1} parent=1 // pred_check
      _
    $region11: #{tpu_custom_call.1} parent=1 // pred_check_branch
      %16 = sbr.rel (0) target = $region13
    $region12: #{tpu_custom_call.1} parent=1 // pred_region
      _
    $region13: #{tpu_custom_call.1} parent=1 // pred_fallthru
      _
    // Predicated region
    $region14: #{tpu_custom_call.1} parent=1 // pred_check
      _
    $region15: #{tpu_custom_call.1} parent=1 // pred_check_branch
      %18 = sbr.rel (0) target = $region17
    $region16: #{tpu_custom_call.1} parent=1 // pred_region
      _
    $region17: #{tpu_custom_call.1} parent=1 // pred_fallthru
      _
    // Predicated region
    $region18: #{tpu_custom_call.1} parent=1 // pred_check
      _
    $region19: #{tpu_custom_call.1} parent=1 // pred_check_branch
      %20 = sbr.rel (0) target = $region21
    $region20: #{tpu_custom_call.1} parent=1 // pred_region
      _
    $region21: #{tpu_custom_call.1} parent=1 // pred_fallthru
      _
    %v22 = vld [vmem:[%s0] sm:$0xff]
    %v23 = vld [vmem:[%s0 + $0x8] sm:$0x3f]
    %v24 = vld [vmem:[%s0 + $0xe] sm:$0xff]
    %v25 = vld [vmem:[%s0 + $0x16] sm:$0x3f]
    %v26 = vld [vmem:[%s0 + $0x1c] sm:$0xff]
    %v27 = vld [vmem:[%s0 + $0x24] sm:$0x3f]
    %v28 = vld [vmem:[%s0 + $0x2a] sm:$0xff]
    %v29 = vld [vmem:[%s0 + $0x32] sm:$0x3f]
    %38 = vst [vmem:[#allocation1] ss:$4 sm:$0xff] %v22
    %s39 = scalar_lea.vmem [#allocation1], 1
    %40 = vst [vmem:[%s39] ss:$4 sm:$0xff] %v24
    %s41 = scalar_lea.vmem [#allocation1], 2
    %42 = vst [vmem:[%s41] ss:$4 sm:$0xff] %v26
    %s43 = scalar_lea.vmem [#allocation1], 3
    %44 = vst [vmem:[%s43] ss:$4 sm:$0xff] %v28
    %s45 = scalar_lea.vmem [#allocation1], 32
    %46 = vst [vmem:[%s45] ss:$4 sm:$0xff] %v23
    %s47 = scalar_lea.vmem [#allocation1], 33
    %48 = vst [vmem:[%s47] ss:$4 sm:$0xff] %v25
    %s49 = scalar_lea.vmem [#allocation1], 34
    %50 = vst [vmem:[%s49] ss:$4 sm:$0xff] %v27
    %s51 = scalar_lea.vmem [#allocation1], 35
    %52 = vst [vmem:[%s51] ss:$4 sm:$0xff] %v29
    %v53 = vld.sshfl [vmem:[#allocation1] sm:$0xff pattern:$0x73625140]
    %v54 = vld.sshfl [vmem:[#allocation1 + $0x8] sm:$0xff pattern:$0x73625140]
    %v55 = vld.sshfl [vmem:[#allocation1 + $0x10] sm:$0xff pattern:$0x73625140]
    %v56 = vld.sshfl [vmem:[#allocation1 + $0x18] sm:$0xff pattern:$0x73625140]
    %v57 = vld.sshfl [vmem:[#allocation1 + $0x20] sm:$0xff pattern:$0x73625140]
    %v58 = vld.sshfl [vmem:[#allocation1 + $0x28] sm:$0xff pattern:$0x73625140]
    %v59 = vld.sshfl [vmem:[#allocation1 + $0x30] sm:$0xff pattern:$0x73625140]
    %v67 = vpack.c.bf16 %v53, %v53
    %v68 = vpack.c.bf16 %v54, %v54
    %v69 = vpack.c.bf16 %v55, %v55
    %v70 = vpack.c.bf16 %v56, %v56
    %v71 = vpack.c.bf16 %v57, %v57
    %v72 = vpack.c.bf16 %v58, %v58
    %v73 = vpack.c.bf16 %v59, %v59
    %v74 = vld [vmem:[%s1] sm:$0xf]
    %v75 = vld [vmem:[%s1 + $0x4] sm:$0xf]
    %v76 = vld [vmem:[%s1 + $0x8] sm:$0xf]
    %v77 = vld [vmem:[%s1 + $0xc] sm:$0xf]
    %v78 = vld [vmem:[%s1 + $0x10] sm:$0xf]
    %v79 = vld [vmem:[%s1 + $0x14] sm:$0xf]
    %v80 = vld [vmem:[%s1 + $0x18] sm:$0xf]
    %v81 = vld [vmem:[%s1 + $0x1c] sm:$0xf]
    %v82 = vld [vmem:[%s1 + $0x20] sm:$0xf]
    %v83 = vld [vmem:[%s1 + $0x24] sm:$0xf]
    %v84 = vld [vmem:[%s1 + $0x28] sm:$0xf]
    %v85 = vld [vmem:[%s1 + $0x2c] sm:$0xf]
    %v86 = vld [vmem:[%s1 + $0x30] sm:$0xf]
    %v87 = vld [vmem:[%s1 + $0x34] sm:$0xf]
    %v88 = vld [vmem:[%s1 + $0x38] sm:$0xf]
    %v89 = vld [vmem:[%s1 + $0x3c] sm:$0xf]
    %v90 = vld [vmem:[%s1 + $0x40] sm:$0xf]
    %v91 = vld [vmem:[%s1 + $0x44] sm:$0xf]
    %v92 = vld [vmem:[%s1 + $0x48] sm:$0xf]
    %v93 = vld [vmem:[%s1 + $0x4c] sm:$0xf]
    %v94 = vld [vmem:[%s1 + $0x50] sm:$0xf]
    %v95 = vld [vmem:[%s1 + $0x54] sm:$0xf]
    %v96 = vld [vmem:[%s1 + $0x58] sm:$0xf]
    %v97 = vld [vmem:[%s1 + $0x5c] sm:$0xf]
    %v98 = vld [vmem:[%s1 + $0x60] sm:$0xf]
    %v99 = vld [vmem:[%s1 + $0x64] sm:$0xf]
    %v100 = vld [vmem:[%s1 + $0x68] sm:$0xf]
    %v101 = vld [vmem:[%s1 + $0x6c] sm:$0xf]
    %v102 = vld [vmem:[%s1 + $0x70] sm:$0xf]
    %v103 = vld [vmem:[%s1 + $0x74] sm:$0xf]
    %v104 = vld [vmem:[%s1 + $0x78] sm:$0xf]
    %v105 = vld [vmem:[%s1 + $0x7c] sm:$0xf]
    %v106 = vld [vmem:[%s1 + $0x80] sm:$0xf]
    %v107 = vld [vmem:[%s1 + $0x84] sm:$0xf]
    %v108 = vld [vmem:[%s1 + $0x88] sm:$0xf]
    %v109 = vld [vmem:[%s1 + $0x8c] sm:$0xf]
    %v110 = vld [vmem:[%s1 + $0x90] sm:$0xf]
    %v111 = vld [vmem:[%s1 + $0x94] sm:$0xf]
    %v112 = vld [vmem:[%s1 + $0x98] sm:$0xf]
    %v113 = vld [vmem:[%s1 + $0x9c] sm:$0xf]
    %v114 = vld [vmem:[%s1 + $0xa0] sm:$0xf]
    %v115 = vld [vmem:[%s1 + $0xa4] sm:$0xf]
    %v116 = vld [vmem:[%s1 + $0xa8] sm:$0xf]
    %v117 = vld [vmem:[%s1 + $0xac] sm:$0xf]
    %v118 = vld [vmem:[%s1 + $0xb0] sm:$0xf]
    %v119 = vld [vmem:[%s1 + $0xb4] sm:$0xf]
    %v120 = vld [vmem:[%s1 + $0xb8] sm:$0xf]
    %v121 = vld [vmem:[%s1 + $0xbc] sm:$0xf]
    %v122 = vld [vmem:[%s1 + $0xc0] sm:$0xf]
    %v123 = vld [vmem:[%s1 + $0xc4] sm:$0xf]
    %v124 = vld [vmem:[%s1 + $0xc8] sm:$0xf]
    %v125 = vld [vmem:[%s1 + $0xcc] sm:$0xf]
    %v126 = vld [vmem:[%s1 + $0xd0] sm:$0xf]
    %v127 = vld [vmem:[%s1 + $0xd4] sm:$0xf]
    %v128 = vld [vmem:[%s1 + $0xd8] sm:$0xf]
    %v129 = vld [vmem:[%s1 + $0xdc] sm:$0xf]
    %v130 = vld [vmem:[%s1 + $0xe0] sm:$0xf]
    %v131 = vld [vmem:[%s1 + $0xe4] sm:$0xf]
    %v132 = vld [vmem:[%s1 + $0xe8] sm:$0xf]
    %v133 = vld [vmem:[%s1 + $0xec] sm:$0xf]
    %v134 = vld [vmem:[%s1 + $0xf0] sm:$0xf]
    %v135 = vld [vmem:[%s1 + $0xf4] sm:$0xf]
    %v136 = vld [vmem:[%s1 + $0xf8] sm:$0xf]
    %v137 = vld [vmem:[%s1 + $0xfc] sm:$0xf]
    %v138 = vld [vmem:[%s1 + $0x100] sm:$0xf]
    %v139 = vld [vmem:[%s1 + $0x104] sm:$0xf]
    %v140 = vld [vmem:[%s1 + $0x108] sm:$0xf]
    %v141 = vld [vmem:[%s1 + $0x10c] sm:$0xf]
    %v142 = vld [vmem:[%s1 + $0x110] sm:$0xf]
    %v143 = vld [vmem:[%s1 + $0x114] sm:$0xf]
    %v144 = vld [vmem:[%s1 + $0x118] sm:$0xf]
    %v145 = vld [vmem:[%s1 + $0x11c] sm:$0xf]
    %v146 = vld [vmem:[%s1 + $0x120] sm:$0xf]
    %v147 = vld [vmem:[%s1 + $0x124] sm:$0xf]
    %v148 = vld [vmem:[%s1 + $0x128] sm:$0xf]
    %v149 = vld [vmem:[%s1 + $0x12c] sm:$0xf]
    %v150 = vld [vmem:[%s1 + $0x130] sm:$0xf]
    %v151 = vld [vmem:[%s1 + $0x134] sm:$0xf]
    %v152 = vld [vmem:[%s1 + $0x138] sm:$0xf]
    %v153 = vld [vmem:[%s1 + $0x13c] sm:$0xf]
    %v154 = vld [vmem:[%s1 + $0x140] sm:$0xf]
    %v155 = vld [vmem:[%s1 + $0x144] sm:$0xf]
    %v156 = vld [vmem:[%s1 + $0x148] sm:$0xf]
    %v157 = vld [vmem:[%s1 + $0x14c] sm:$0xf]
    %v158 = vld [vmem:[%s1 + $0x150] sm:$0xf]
    %v159 = vld [vmem:[%s1 + $0x154] sm:$0xf]
    %v160 = vld [vmem:[%s1 + $0x158] sm:$0xf]
    %v161 = vld [vmem:[%s1 + $0x15c] sm:$0xf]
    %v162 = vld [vmem:[%s1 + $0x160] sm:$0xf]
    %v163 = vld [vmem:[%s1 + $0x164] sm:$0xf]
    %v164 = vld [vmem:[%s1 + $0x168] sm:$0xf]
    %v165 = vld [vmem:[%s1 + $0x16c] sm:$0xf]
    %v166 = vld [vmem:[%s1 + $0x170] sm:$0xf]
    %v167 = vld [vmem:[%s1 + $0x174] sm:$0xf]
    %v168 = vld [vmem:[%s1 + $0x178] sm:$0xf]
    %v169 = vld [vmem:[%s1 + $0x17c] sm:$0xf]
    %v170 = vld [vmem:[%s1 + $0x180] sm:$0xf]
    %v171 = vld [vmem:[%s1 + $0x184] sm:$0xf]
    %v172 = vld [vmem:[%s2] sm:$0x1]
    %v174 = vperm.slane %v172, 0
    %v274 = vunpack.c.l.b16 %v74
    %v275 = vunpack.c.l.b16 %v75
    %v276 = vunpack.c.l.b16 %v76
    %v277 = vunpack.c.l.b16 %v77
    %v278 = vunpack.c.l.b16 %v78
    %v279 = vunpack.c.l.b16 %v79
    %v280 = vunpack.c.l.b16 %v80
    %v281 = vunpack.c.l.b16 %v81
    %v282 = vunpack.c.l.b16 %v82
    %v283 = vunpack.c.l.b16 %v83
    %v284 = vunpack.c.l.b16 %v84
    %v285 = vunpack.c.l.b16 %v85
    %v286 = vunpack.c.l.b16 %v86
    %v287 = vunpack.c.l.b16 %v87
    %v288 = vunpack.c.l.b16 %v88
    %v289 = vunpack.c.l.b16 %v89
    %v290 = vunpack.c.l.b16 %v90
    %v291 = vunpack.c.l.b16 %v91
    %v292 = vunpack.c.l.b16 %v92
    %v293 = vunpack.c.l.b16 %v93
    %v294 = vunpack.c.l.b16 %v94
    %v295 = vunpack.c.l.b16 %v95
    %v296 = vunpack.c.l.b16 %v96
    %v297 = vunpack.c.l.b16 %v97
    %v298 = vunpack.c.l.b16 %v98
    %v299 = vunpack.c.l.b16 %v99
    %v300 = vunpack.c.l.b16 %v100
    %v301 = vunpack.c.l.b16 %v101
    %v302 = vunpack.c.l.b16 %v102
    %v303 = vunpack.c.l.b16 %v103
    %v304 = vunpack.c.l.b16 %v104
    %v305 = vunpack.c.l.b16 %v105
    %v306 = vunpack.c.l.b16 %v106
    %v307 = vunpack.c.l.b16 %v107
    %v308 = vunpack.c.l.b16 %v108
    %v309 = vunpack.c.l.b16 %v109
    %v310 = vunpack.c.l.b16 %v110
    %v311 = vunpack.c.l.b16 %v111
    %v312 = vunpack.c.l.b16 %v112
    %v313 = vunpack.c.l.b16 %v113
    %v314 = vunpack.c.l.b16 %v114
    %v315 = vunpack.c.l.b16 %v115
    %v316 = vunpack.c.l.b16 %v116
    %v317 = vunpack.c.l.b16 %v117
    %v318 = vunpack.c.l.b16 %v118
    %v319 = vunpack.c.l.b16 %v119
    %v320 = vunpack.c.l.b16 %v120
    %v321 = vunpack.c.l.b16 %v121
    %v322 = vunpack.c.l.b16 %v122
    %v323 = vunpack.c.l.b16 %v123
    %v324 = vunpack.c.l.b16 %v124
    %v325 = vunpack.c.l.b16 %v125
    %v326 = vunpack.c.l.b16 %v126
    %v327 = vunpack.c.l.b16 %v127
    %v328 = vunpack.c.l.b16 %v128
    %v329 = vunpack.c.l.b16 %v129
    %v330 = vunpack.c.l.b16 %v130
    %v331 = vunpack.c.l.b16 %v131
    %v332 = vunpack.c.l.b16 %v132
    %v333 = vunpack.c.l.b16 %v133
    %v334 = vunpack.c.l.b16 %v134
    %v335 = vunpack.c.l.b16 %v135
    %v336 = vunpack.c.l.b16 %v136
    %v337 = vunpack.c.l.b16 %v137
    %v338 = vunpack.c.l.b16 %v138
    %v339 = vunpack.c.l.b16 %v139
    %v340 = vunpack.c.l.b16 %v140
    %v341 = vunpack.c.l.b16 %v141
    %v342 = vunpack.c.l.b16 %v142
    %v343 = vunpack.c.l.b16 %v143
    %v344 = vunpack.c.l.b16 %v144
    %v345 = vunpack.c.l.b16 %v145
    %v346 = vunpack.c.l.b16 %v146
    %v347 = vunpack.c.l.b16 %v147
    %v348 = vunpack.c.l.b16 %v148
    %v349 = vunpack.c.l.b16 %v149
    %v350 = vunpack.c.l.b16 %v150
    %v351 = vunpack.c.l.b16 %v151
    %v352 = vunpack.c.l.b16 %v152
    %v353 = vunpack.c.l.b16 %v153
    %v354 = vunpack.c.l.b16 %v154
    %v355 = vunpack.c.l.b16 %v155
    %v356 = vunpack.c.l.b16 %v156
    %v357 = vunpack.c.l.b16 %v157
    %v358 = vunpack.c.l.b16 %v158
    %v359 = vunpack.c.l.b16 %v159
    %v360 = vunpack.c.l.b16 %v160
    %v361 = vunpack.c.l.b16 %v161
    %v362 = vunpack.c.l.b16 %v162
    %v363 = vunpack.c.l.b16 %v163
    %v364 = vunpack.c.l.b16 %v164
    %v365 = vunpack.c.l.b16 %v165
    %v366 = vunpack.c.l.b16 %v166
    %v367 = vunpack.c.l.b16 %v167
    %v368 = vunpack.c.l.b16 %v168
    %v369 = vunpack.c.l.b16 %v169
    %v370 = vunpack.c.l.b16 %v170
    %v371 = vunpack.c.l.b16 %v171
    %v372 = vpack.c.b16 %v275, %v274
    %v373 = vpack.c.b16 %v277, %v276
    %v374 = vpack.c.b16 %v279, %v278
    %v375 = vpack.c.b16 %v281, %v280
    %v376 = vpack.c.b16 %v283, %v282
    %v377 = vpack.c.b16 %v285, %v284
    %v378 = vpack.c.b16 %v287, %v286
    %v379 = vpack.c.b16 %v289, %v288
    %v380 = vpack.c.b16 %v291, %v290
    %v381 = vpack.c.b16 %v293, %v292
    %v382 = vpack.c.b16 %v295, %v294
    %v383 = vpack.c.b16 %v297, %v296
    %v384 = vpack.c.b16 %v299, %v298
    %v385 = vpack.c.b16 %v301, %v300
    %v386 = vpack.c.b16 %v303, %v302
    %v387 = vpack.c.b16 %v305, %v304
    %v388 = vpack.c.b16 %v307, %v306
    %v389 = vpack.c.b16 %v309, %v308
    %v390 = vpack.c.b16 %v311, %v310
    %v391 = vpack.c.b16 %v313, %v312
    %v392 = vpack.c.b16 %v315, %v314
    %v393 = vpack.c.b16 %v317, %v316
    %v394 = vpack.c.b16 %v319, %v318
    %v395 = vpack.c.b16 %v321, %v320
    %v396 = vpack.c.b16 %v323, %v322
    %v397 = vpack.c.b16 %v325, %v324
    %v398 = vpack.c.b16 %v327, %v326
    %v399 = vpack.c.b16 %v329, %v328
    %v400 = vpack.c.b16 %v331, %v330
    %v401 = vpack.c.b16 %v333, %v332
    %v402 = vpack.c.b16 %v335, %v334
    %v403 = vpack.c.b16 %v337, %v336
    %v404 = vpack.c.b16 %v339, %v338
    %v405 = vpack.c.b16 %v341, %v340
    %v406 = vpack.c.b16 %v343, %v342
    %v407 = vpack.c.b16 %v345, %v344
    %v408 = vpack.c.b16 %v347, %v346
    %v409 = vpack.c.b16 %v349, %v348
    %v410 = vpack.c.b16 %v351, %v350
    %v411 = vpack.c.b16 %v353, %v352
    %v412 = vpack.c.b16 %v355, %v354
    %v413 = vpack.c.b16 %v357, %v356
    %v414 = vpack.c.b16 %v359, %v358
    %v415 = vpack.c.b16 %v361, %v360
    %v416 = vpack.c.b16 %v363, %v362
    %v417 = vpack.c.b16 %v365, %v364
    %v418 = vpack.c.b16 %v367, %v366
    %v419 = vpack.c.b16 %v369, %v368
    %v420 = vpack.c.b16 %v371, %v370
    %vm470 = vcmask 130048
    %v472 = vsel %vm470, %v73, 0
    %474 = vmatpush.bf16.msra.mxu0 %v379
    %475 = vmatpush.bf16.msra.mxu0 %v378
    %476 = vmatpush.bf16.msra.mxu0 %v377
    %477 = vmatpush.bf16.msra.mxu0 %v376
    %478 = vmatpush.bf16.msra.mxu0 %v375
    %479 = vmatpush.bf16.msra.mxu0 %v374
    %480 = vmatpush.bf16.msra.mxu0 %v373
    %481 = vmatpush.bf16.msra.mxu0 %v372
    %482 = vmatmul.bf16.gmra.mxu0 %v67
    %v483 = vpop.f32.mrf.mxu0
    %v484 = vadd.f32 %v174, %v483
    %v485 = vpop.f32.mrf.mxu0
    %486 = vdwg.mxu0
    %487 = vmatpush.bf16.msra.mxu0 %v387
    %488 = vmatpush.bf16.msra.mxu0 %v386
    %489 = vmatpush.bf16.msra.mxu0 %v385
    %490 = vmatpush.bf16.msra.mxu0 %v384
    %491 = vmatpush.bf16.msra.mxu0 %v383
    %492 = vmatpush.bf16.msra.mxu0 %v382
    %493 = vmatpush.bf16.msra.mxu0 %v381
    %494 = vmatpush.bf16.msra.mxu0 %v380
    %495 = vmatmul.bf16.gmra.mxu0 %v68
    %v496 = vpop.f32.mrf.mxu0
    %v497 = vadd.f32 %v484, %v496
    %v498 = vpop.f32.mrf.mxu0
    %499 = vdwg.mxu0
    %500 = vmatpush.bf16.msra.mxu0 %v395
    %501 = vmatpush.bf16.msra.mxu0 %v394
    %502 = vmatpush.bf16.msra.mxu0 %v393
    %503 = vmatpush.bf16.msra.mxu0 %v392
    %504 = vmatpush.bf16.msra.mxu0 %v391
    %505 = vmatpush.bf16.msra.mxu0 %v390
    %506 = vmatpush.bf16.msra.mxu0 %v389
    %507 = vmatpush.bf16.msra.mxu0 %v388
    %508 = vmatmul.bf16.gmra.mxu0 %v69
    %v509 = vpop.f32.mrf.mxu0
    %v510 = vadd.f32 %v497, %v509
    %v511 = vpop.f32.mrf.mxu0
    %512 = vdwg.mxu0
    %513 = vmatpush.bf16.msra.mxu0 %v403
    %514 = vmatpush.bf16.msra.mxu0 %v402
    %515 = vmatpush.bf16.msra.mxu0 %v401
    %516 = vmatpush.bf16.msra.mxu0 %v400
    %517 = vmatpush.bf16.msra.mxu0 %v399
    %518 = vmatpush.bf16.msra.mxu0 %v398
    %519 = vmatpush.bf16.msra.mxu0 %v397
    %520 = vmatpush.bf16.msra.mxu0 %v396
    %521 = vmatmul.bf16.gmra.mxu0 %v70
    %v522 = vpop.f32.mrf.mxu0
    %v523 = vadd.f32 %v510, %v522
    %v524 = vpop.f32.mrf.mxu0
    %525 = vdwg.mxu0
    %526 = vmatpush.bf16.msra.mxu0 %v411
    %527 = vmatpush.bf16.msra.mxu0 %v410
    %528 = vmatpush.bf16.msra.mxu0 %v409
    %529 = vmatpush.bf16.msra.mxu0 %v408
    %530 = vmatpush.bf16.msra.mxu0 %v407
    %531 = vmatpush.bf16.msra.mxu0 %v406
    %532 = vmatpush.bf16.msra.mxu0 %v405
    %533 = vmatpush.bf16.msra.mxu0 %v404
    %534 = vmatmul.bf16.gmra.mxu0 %v71
    %v535 = vpop.f32.mrf.mxu0
    %v536 = vadd.f32 %v523, %v535
    %v537 = vpop.f32.mrf.mxu0
    %538 = vdwg.mxu0
    %539 = vmatpush.bf16.msra.mxu0 %v419
    %540 = vmatpush.bf16.msra.mxu0 %v418
    %541 = vmatpush.bf16.msra.mxu0 %v417
    %542 = vmatpush.bf16.msra.mxu0 %v416
    %543 = vmatpush.bf16.msra.mxu0 %v415
    %544 = vmatpush.bf16.msra.mxu0 %v414
    %545 = vmatpush.bf16.msra.mxu0 %v413
    %546 = vmatpush.bf16.msra.mxu0 %v412
    %547 = vmatmul.bf16.gmra.mxu0 %v72
    %v548 = vpop.f32.mrf.mxu0
    %v549 = vadd.f32 %v536, %v548
    %v550 = vpop.f32.mrf.mxu0
    %551 = vdwg.mxu0
    %552 = vmatpush.bf16.msra.mxu0 0
    %553 = vmatpush.bf16.msra.mxu0 0
    %554 = vmatpush.bf16.msra.mxu0 0
    %555 = vmatpush.bf16.msra.mxu0 0
    %556 = vmatpush.bf16.msra.mxu0 0
    %557 = vmatpush.bf16.msra.mxu0 0
    %558 = vmatpush.bf16.msra.mxu0 0
    %559 = vmatpush.bf16.msra.mxu0 %v420
    %560 = vmatmul.bf16.gmra.mxu0 %v472
    %v561 = vpop.f32.mrf.mxu0
    %v562 = vadd.f32 %v549, %v561
    %v563 = vpop.f32.mrf.mxu0
    %564 = vdwg.mxu0
    %v565 = vmax.f32 %v562, 0.0
    %v566 = vpack.c.bf16 %v565, %v565
    %v567 = vld [vmem:[%s3] sm:$0xf]
    %v568 = vld [vmem:[%s3 + $0x4] sm:$0xf]
    %v569 = vld [vmem:[%s3 + $0x8] sm:$0xf]
    %v570 = vld [vmem:[%s3 + $0xc] sm:$0xf]
    %v571 = vld [vmem:[%s4] sm:$0x1]
    %v573 = vperm.slane %v571, 0
    %v579 = vunpack.c.l.b16 %v567
    %v580 = vunpack.c.l.b16 %v568
    %v581 = vunpack.c.l.b16 %v569
    %v582 = vunpack.c.l.b16 %v570
    %v583 = vpack.c.b16 %v580, %v579
    %v584 = vpack.c.b16 %v582, %v581
    %vm587 = vcmask 261120
    %v589 = vsel %vm587, %v566, 0
    %591 = vmatpush.bf16.msra.mxu0 0
    %592 = vmatpush.bf16.msra.mxu0 0
    %593 = vmatpush.bf16.msra.mxu0 0
    %594 = vmatpush.bf16.msra.mxu0 0
    %595 = vmatpush.bf16.msra.mxu0 0
    %596 = vmatpush.bf16.msra.mxu0 0
    %597 = vmatpush.bf16.msra.mxu0 %v584
    %598 = vmatpush.bf16.msra.mxu0 %v583
    %599 = vmatmul.bf16.gmra.mxu0 %v589
    %v600 = vpop.f32.mrf.mxu0
    %v601 = vadd.f32 %v573, %v600
    %v602 = vpop.f32.mrf.mxu0
    %603 = vdwg.mxu0
    %v604 = vmax.f32 %v601, 0.0
    %vm605 = vcmask 80896
    %606 = vst.msk [vmem:[#allocation2] sm:$0xff] %vm605, %v604
    // Predicated region
    $region22: #{tpu_custom_call.1} parent=1 // pred_check
      _
    $region23: #{tpu_custom_call.1} parent=1 // pred_check_branch
      %608 = sbr.rel (0) target = $region25
    $region24: #{tpu_custom_call.1} parent=1 // pred_region
      %610 = vsyncadd [#allocation3], 96
      %s611 = sshll.u32 [#allocation2], 4
      %s612 = int_to_ptr.vmem [resolvable:$true] %s611
      %s613 = sshll.u32 %s5, 4
      %s614 = int_to_ptr.hbm [resolvable:$true] %s613
      %619 = dma.vmem_to_hbm [thread:$0]  %s612, 32, %s614, [#allocation3], 32, 32, 2
    $region25: #{tpu_custom_call.1} parent=1 // pred_fallthru
      _
    // Predicated region
    $region26: #{tpu_custom_call.1} parent=1 // pred_check
      _
    $region27: #{tpu_custom_call.1} parent=1 // pred_check_branch
      %621 = sbr.rel (0) target = $region29
    $region28: #{tpu_custom_call.1} parent=1 // pred_region
      %623 = dma.done [#allocation3], 128
    $region29: #{tpu_custom_call.1} parent=1 // pred_fallthru
      _
    %624 = vsyncpa [#allocation3], 1

</llo_original>
